<compile_context>
chip_gen: v5e
topology: v5e:2x2
jax: 0.10.0
libtpu: 0.0.40
codegen_flags: <defaults>
</compile_context>

<pallas_src>
import functools

import jax
import jax.numpy as jnp
from jax.experimental import pallas as pl
from jax.experimental.pallas import tpu as pltpu


def _softmax_pick_kernel(plw_ref, g_ref, out_ref, *, num_class):
    """grid = (row_blocks, num_prompts); prompt axis is the trailing reduction."""
    j = pl.program_id(1)

    @pl.when(j == 0)
    def _init():
        out_ref[...] = jnp.zeros_like(out_ref)

    rows = g_ref[0].astype(jnp.float32)                       # (R, V_pad)
    r, v = rows.shape

    # Online-stable softmax pieces; never normalize the full row.
    m = jnp.max(rows, axis=-1, keepdims=True)                 # (R, 1)
    e = jnp.exp(rows - m)                                     # (R, V_pad)
    inv = pl.reciprocal(jnp.sum(e, axis=-1, keepdims=True), approx=True)  # (R, 1)

    lane = jax.lax.broadcasted_iota(jnp.int32, (r, v), 1)
    cls = jax.lax.broadcasted_iota(jnp.int32, (r, num_class), 1)

    contrib = jnp.zeros((r, num_class), jnp.float32)
    for c in range(num_class):                                # static, num_class ~ 3
        tok = plw_ref[j, c]                                   # SMEM scalar read
        picked = jnp.sum(jnp.where(lane == tok, e, 0.0), axis=-1, keepdims=True)
        contrib = contrib + jnp.where(cls == c, picked, 0.0)

    out_ref[...] = out_ref[...] + contrib * inv               # accumulate over prompts


def _prompt_sum_kernel(c_ref, out_ref, *, num_prompts):
    """sum_logits fast path: c_ref is (P, R, C) pre-picked label-word logits."""
    acc = c_ref[0].astype(jnp.float32)
    for p in range(1, num_prompts):                           # static small loop
        acc = acc + c_ref[p].astype(jnp.float32)
    out_ref[...] = acc


def multi_prompt_logit_head(input_ids, lm_logits, pseudo_label_words, *,
                            target_token_id, num_prompts,
                            merge_behavior="sum_logits", lm_type="bert"):
    """Pallas head.  lm_logits = external LM's vocab logits [B_total, S, V]."""
    b_total, _, vocab = lm_logits.shape
    num_prompts = int(num_prompts)
    num_class = int(pseudo_label_words.shape[1])
    real_batch = b_total // num_prompts

    # Target-token position per (review x prompt) row, as in the PyTorch code:
    #   BERT: first occurrence of target_token_id; GPT2: first occurrence - 1
    #   (clamped to 0 so the gather is always in-bounds).
    first = jnp.argmax(input_ids == target_token_id, axis=1).astype(jnp.int32)
    tgt = jnp.maximum(first - 1, 0) if lm_type == "gpt2" else first

    # Gather the [V] logit row at the target position of every row (XLA gather;
    # only B_total rows ever leave HBM).
    gathered = jnp.take_along_axis(lm_logits, tgt[:, None, None], axis=1)[:, 0, :]

    row_tile = real_batch if real_batch < 8 else 8             # sublane-dense tile
    rb_pad = pl.cdiv(real_batch, row_tile) * row_tile

    if merge_behavior == "sum_probabilities":
        vocab_pad = pl.cdiv(vocab, 128) * 128
        neg = jnp.asarray(-1e9, gathered.dtype)                 # exp(pad - m) == 0
        g = jnp.pad(gathered, ((0, 0), (0, vocab_pad - vocab)), constant_values=neg)
        # Row index in the flat batch is i + real_batch * j  ->  g[j, i].
        g = g.reshape(num_prompts, real_batch, vocab_pad)
        g = jnp.pad(g, ((0, 0), (0, rb_pad - real_batch), (0, 0)))
        plw = pseudo_label_words.astype(jnp.int32)

        kernel = functools.partial(_softmax_pick_kernel, num_class=num_class)
        out = pl.pallas_call(
            kernel,
            out_shape=jax.ShapeDtypeStruct((rb_pad, num_class), jnp.float32),
            grid_spec=pltpu.PrefetchScalarGridSpec(
                num_scalar_prefetch=1,                          # plw -> SMEM
                grid=(rb_pad // row_tile, num_prompts),
                in_specs=[pl.BlockSpec((1, row_tile, vocab_pad),
                                       lambda i, j, plw_ref: (j, i, 0))],
                out_specs=pl.BlockSpec((row_tile, num_class),
                                       lambda i, j, plw_ref: (i, 0)),
            ),
            compiler_params=pltpu.CompilerParams(
                dimension_semantics=("parallel", "arbitrary"),
                vmem_limit_bytes=32 * 1024 * 1024),
        )(plw, g)
        return out[:real_batch]

    elif merge_behavior == "sum_logits":
        # Only the num_class label columns are ever needed: pick them in the
        # wrapper (tiny XLA gather) and run a prompt-sum kernel.  HBM traffic is
        # O(B_total * num_class) instead of O(B_total * vocab).
        g = gathered.reshape(num_prompts, real_batch, vocab)
        idx = jnp.broadcast_to(pseudo_label_words[:, None, :].astype(jnp.int32),
                               (num_prompts, real_batch, num_class))
        compact = jnp.take_along_axis(g, idx, axis=2)           # [P, RB, C]
        compact = jnp.pad(compact, ((0, 0), (0, rb_pad - real_batch), (0, 0)))

        kernel = functools.partial(_prompt_sum_kernel, num_prompts=num_prompts)
        out = pl.pallas_call(
            kernel,
            out_shape=jax.ShapeDtypeStruct((rb_pad, num_class), jnp.float32),
            grid=(rb_pad // row_tile,),
            in_specs=[pl.BlockSpec((num_prompts, row_tile, num_class),
                                   lambda i: (0, i, 0))],
            out_specs=pl.BlockSpec((row_tile, num_class), lambda i: (i, 0)),
            compiler_params=pltpu.CompilerParams(
                dimension_semantics=("parallel",),
                vmem_limit_bytes=32 * 1024 * 1024),
        )(compact)
        return out[:real_batch]

    raise ValueError(f"Unsupported merge_behavior: {merge_behavior}")


def _reference(input_ids, lm_logits, pseudo_label_words, *, target_token_id,
               num_prompts, merge_behavior, lm_type="bert"):
    """Pure-JAX reference mirroring the PyTorch forward loop."""
    b_total, _, vocab = lm_logits.shape
    real_batch = b_total // num_prompts

    first = jnp.argmax(input_ids == target_token_id, axis=1)
    tgt = jnp.maximum(first - 1, 0) if lm_type == "gpt2" else first
    gathered = lm_logits[jnp.arange(b_total), tgt]               # [B_total, V]
    if merge_behavior == "sum_probabilities":
        gathered = jax.nn.softmax(gathered.astype(jnp.float32), axis=-1)

    g = gathered.reshape(num_prompts, real_batch, vocab)         # rows: i + rb*j
    per_prompt = jnp.stack(
        [g[j][:, pseudo_label_words[j]] for j in range(num_prompts)], axis=0)
    return per_prompt.sum(axis=0).astype(jnp.float32)            # [rb, C]


if __name__ == "__main__":
    # Small deterministic example shapes.
    real_batch = 2
    num_prompts = 2
    b_total = real_batch * num_prompts
    seq = 8
    vocab = 250          # non-multiple of 128 on purpose (exercises padding)
    num_class = 3
    target_token_id = 103

    key = jax.random.PRNGKey(0)
    k_ids, k_pos, k_logits = jax.random.split(key, 3)

    # Random token ids in [0, 100), then exactly one target token per row.
    input_ids = jax.random.randint(k_ids, (b_total, seq), 0, 100, dtype=jnp.int32)
    tgt_pos = jax.random.randint(k_pos, (b_total,), 1, seq, dtype=jnp.int32)
    input_ids = input_ids.at[jnp.arange(b_total), tgt_pos].set(target_token_id)

    # Stand-in for lm_outputs.logits (the untranslated external LM forward).
    lm_logits = jax.random.normal(k_logits, (b_total, seq, vocab), jnp.float32)

    # pseudo_label_words[j] = vocab ids of the num_class label words of prompt j.
    pseudo_label_words = jnp.array([[7, 33, 91], [12, 54, 200]], dtype=jnp.int32)

    for lm_type in ("bert", "gpt2"):
        for merge in ("sum_logits", "sum_probabilities"):
            out = multi_prompt_logit_head(
                input_ids, lm_logits, pseudo_label_words,
                target_token_id=target_token_id,
                num_prompts=num_prompts,
                merge_behavior=merge,
                lm_type=lm_type,
            )
            out = jax.block_until_ready(out)

            expected = _reference(
                input_ids, lm_logits, pseudo_label_words,
                target_token_id=target_token_id,
                num_prompts=num_prompts,
                merge_behavior=merge,
                lm_type=lm_type,
            )

            assert out.shape == (real_batch, num_class)
            # approx reciprocal (EUP) in the probabilities path -> looser tol.
            tol = 2e-3 if merge == "sum_probabilities" else 1e-5
            assert jnp.allclose(out, expected, atol=tol, rtol=tol), (
                f"mismatch ({lm_type}, {merge}):\n{out}\n!=\n{expected}")

    print("KERNEL_OK")
</pallas_src>

<mosaic_0001>
module attributes {stable_mosaic.version = 11 : i64} {
  func.func @_prompt_sum_kernel(%arg0: i32, %arg1: memref<2x2x3xf32, #tpu.memory_space<vmem>>, %arg2: memref<2x3xf32, #tpu.memory_space<vmem>>) attributes {dimension_semantics = [#tpu.dimension_semantics<parallel>], iteration_bounds = array<i64: 1>, scalar_prefetch = 0 : i64, scratch_operands = 0 : i64, tpu.core_type = #tpu.core_type<tc>, window_params = [{transform_indices = @transform_0, window_bounds = array<i64: 2, 2, 3>}, {transform_indices = @transform_1, window_bounds = array<i64: 2, 3>}]} {
    %c0 = arith.constant 0 : index
    %c0_0 = arith.constant 0 : index
    %c0_1 = arith.constant 0 : index
    %0 = vector.load %arg1[%c0, %c0_0, %c0_1] : memref<2x2x3xf32, #tpu.memory_space<vmem>>, vector<1x2x3xf32>
    %1 = vector.shape_cast %0 : vector<1x2x3xf32> to vector<2x3xf32>
    %c1 = arith.constant 1 : index
    %c0_2 = arith.constant 0 : index
    %c0_3 = arith.constant 0 : index
    %2 = vector.load %arg1[%c1, %c0_2, %c0_3] : memref<2x2x3xf32, #tpu.memory_space<vmem>>, vector<1x2x3xf32>
    %3 = vector.shape_cast %2 : vector<1x2x3xf32> to vector<2x3xf32>
    %4 = arith.addf %1, %3 : vector<2x3xf32>
    %c0_4 = arith.constant 0 : index
    %c0_5 = arith.constant 0 : index
    %5 = vector.load %arg2[%c0_4, %c0_5] : memref<2x3xf32, #tpu.memory_space<vmem>>, vector<2x3xf32>
    tpu.vector_store %arg2[%c0_4, %c0_5], %4 {strides = array<i32>} : memref<2x3xf32, #tpu.memory_space<vmem>>, vector<2x3xf32>,
    return
  }
  func.func @transform_0(%arg0: i32) -> (i32, i32, i32) {
    %c0_i32 = arith.constant 0 : i32
    %c0_i32_0 = arith.constant 0 : i32
    %c0_i32_1 = arith.constant 0 : i32
    return %c0_i32, %arg0, %c0_i32_0 : i32, i32, i32
  }
  func.func @transform_1(%arg0: i32) -> (i32, i32) {
    %c0_i32 = arith.constant 0 : i32
    %c0_i32_0 = arith.constant 0 : i32
    return %arg0, %c0_i32 : i32, i32
  }
}

</mosaic_0001>

<llo_original>
// kernel: tpu_custom_call.1
$region0: #{tpu_custom_call.1}
  #allocation0 [shape = 'u32[]', space=smem, size = 0x4, offset = 0x4, fixed_abs, tag = 'smem constant byte address 0x4 - core index']
  #allocation1 [shape = 'u32[72,128]{1,0:T(1,128)}', space=vmem, size = 0x9000, scoped, tag = 'internal scratch']
  %s0 = inlined_call_operand.hbm [shape: f32[2,2,3], index: 0, kind: input, shape index: {}]
  %s1 = inlined_call_operand.hbm [shape: f32[2,3], index: 1, kind: output, shape index: {}]
  %s2 = sld [smem:[#allocation0]]
  $region18: #{tpu_custom_call.1} parent=0
    _
  %s4 = ssub.s32 1, %s2
  %s5 = scalar_select 0, %s4, %s2
  $region1: #{tpu_custom_call.1} parent=0
    #allocation2 [shape = 'u8[2048]{0}', space=vmem, size = 0x800, scoped, tag = 'input window, operand 0, single buffered']
    #allocation3 [shape = 's32[1]{0}', space=sflag, size = 0x4, scoped, tag = 'scoped memory for tpu_custom_call.1']
    #allocation4 [shape = 's32[1]{0}', space=sflag, size = 0x4, scoped, tag = 'scoped memory for tpu_custom_call.1']
    #allocation5 [shape = 'u8[1024]{0}', space=vmem, size = 0x400, scoped, tag = 'output window, operand 0, single buffered']
    %6 = vsyncpa [#allocation3], 0
    %7 = vsyncpa [#allocation4], 0
    // Predicated region
    $region2: #{tpu_custom_call.1} parent=1 // pred_check
      _
    $region3: #{tpu_custom_call.1} parent=1 // pred_check_branch
      %9 = sbr.rel (0) target = $region5
    $region4: #{tpu_custom_call.1} parent=1 // pred_region
      %11 = vsyncadd [#allocation3], 0
      %s12 = sshll.u32 %s0, 4
      %s13 = int_to_ptr.hbm [resolvable:$true] %s12
      %s14 = sshll.u32 [#allocation2], 4
      %s15 = int_to_ptr.vmem [resolvable:$true] %s14
      %20 = dma.hbm_to_vmem [thread:$0]  %s13, 64, %s15, [#allocation3], 32, 32, 2
    $region5: #{tpu_custom_call.1} parent=1 // pred_fallthru
      _
    // Predicated region
    $region6: #{tpu_custom_call.1} parent=1 // pred_check
      _
    $region7: #{tpu_custom_call.1} parent=1 // pred_check_branch
      %22 = sbr.rel (0) target = $region9
    $region8: #{tpu_custom_call.1} parent=1 // pred_region
      %24 = dma.done [#allocation3], 64
    $region9: #{tpu_custom_call.1} parent=1 // pred_fallthru
      _
    %v25 = vld [vmem:[#allocation2] sm:$0x3]
    %s26 = scalar_lea.vmem [#allocation2], 2
    %v27 = vld [vmem:[%s26] sm:$0x3]
    %v28 = vadd.f32 %v25, %v27
    %vm29 = vcmask 17408
    %30 = vst.msk [vmem:[#allocation5] sm:$0x3] %vm29, %v28
    // Predicated region
    $region10: #{tpu_custom_call.1} parent=1 // pred_check
      _
    $region11: #{tpu_custom_call.1} parent=1 // pred_check_branch
      %32 = sbr.rel (0) target = $region13
    $region12: #{tpu_custom_call.1} parent=1 // pred_region
      %34 = vsyncadd [#allocation4], 0
      %s36 = sshll.u32 [#allocation5], 4
      %s37 = int_to_ptr.vmem [resolvable:$true] %s36
      %s38 = sshll.u32 %s1, 4
      %s39 = int_to_ptr.hbm [resolvable:$true] %s38
      %41 = dma.vmem_to_hbm [thread:$0]  %s37, 32, %s39, [#allocation4]
    $region13: #{tpu_custom_call.1} parent=1 // pred_fallthru
      _
    // Predicated region
    $region14: #{tpu_custom_call.1} parent=1 // pred_check
      _
    $region15: #{tpu_custom_call.1} parent=1 // pred_check_branch
      %43 = sbr.rel (0) target = $region17
    $region16: #{tpu_custom_call.1} parent=1 // pred_region
      %45 = dma.done [#allocation4], 32
    $region17: #{tpu_custom_call.1} parent=1 // pred_fallthru
      _
    %46 = vsyncpa [#allocation3], 1
    %47 = vsyncpa [#allocation4], 1

</llo_original>
